<compile_context>
chip_gen: v7x
topology: tpu7x:2x2x1
jax: 0.10.0
libtpu: 0.0.40
codegen_flags: <defaults>
</compile_context>

<pallas_src>
import jax
import jax.numpy as jnp
import numpy as np
from jax import lax
from jax.experimental import pallas as pl
from jax.experimental.pallas import tpu as pltpu

# ---------------- model configuration (mirrors the PyTorch module) -----------
NPOINTS = 16                                   # vertices.shape[0] (synthetic, small)
BRANCH_LAYERS1 = [NPOINTS, 12, 24, 12, 1]
BRANCH_LAYERS2 = [NPOINTS, 12, 24, 12, 1]
TRUNK_LAYERS   = [3, 12, 24, 12, 1]
N_LAYERS = 4                                   # each CustomNet has 4 Linear layers

F_IN_PAD = 128          # fused feature width: 16 + 16 + 3 = 35, lane-padded to 128
DEFAULT_TILE_R = 512    # rows per grid step (multiple of 8; well under VMEM on v7x)


def _round_up(x, m):
    return ((x + m - 1) // m) * m


# ---------------- Pallas kernel ----------------------------------------------
def deeponet_kernel(x_ref, w0_ref, b0_ref, w1_ref, b1_ref, w2_ref, b2_ref,
                    w3_ref, b3_ref, out_ref):
    """One row-tile of the fused DeepONet.

    x_ref : (TILE_R, 128)  fused rows [x1 | x2 | xc | zero-pad]
    w0/b0 : (128, 36) / (1, 36)   block-diagonal layer 0
    w1/b1 : (36, 72)  / (1, 72)   block-diagonal layer 1
    w2/b2 : (72, 36)  / (1, 36)   block-diagonal layer 2
    w3/b3 : (2, 36)   / (2, 1)    final layer, pre-transposed & pre-fused:
                                  row 0 -> branch1+branch2, row 1 -> trunk
    out   : (1, 1, TILE_R)        lane-dense per-row result
    """
    x = x_ref[...]
    h = jnp.maximum(
        jnp.dot(x, w0_ref[...], preferred_element_type=jnp.float32) + b0_ref[...], 0.0)
    h = jnp.maximum(
        jnp.dot(h, w1_ref[...], preferred_element_type=jnp.float32) + b1_ref[...], 0.0)
    h = jnp.maximum(
        jnp.dot(h, w2_ref[...], preferred_element_type=jnp.float32) + b2_ref[...], 0.0)

    # Final layer computed transposed (contract the 36-wide hidden axis of both
    # operands) so the result is already lane-dense: (2, TILE_R).
    rows = lax.dot_general(
        w3_ref[...], h, (((1,), (1,)), ((), ())),
        preferred_element_type=jnp.float32) + b3_ref[...]

    # (branch1 + branch2) * trunk per row.  torch.sum over the size-1 feature
    # axis is a no-op and is dropped.
    combined = rows[0:1, :] * rows[1:2, :]          # (1, TILE_R)
    out_ref[...] = combined[None]                   # (1, 1, TILE_R)


# ---------------- host-side fused weight packing ------------------------------
def _block_diag(mats):
    rows = sum(m.shape[0] for m in mats)
    cols = sum(m.shape[1] for m in mats)
    out = jnp.zeros((rows, cols), jnp.float32)
    r = c = 0
    for m in mats:
        out = out.at[r:r + m.shape[0], c:c + m.shape[1]].set(m.astype(jnp.float32))
        r += m.shape[0]
        c += m.shape[1]
    return out


def pack_fused_params(params, d1, d2, dc, f_in=F_IN_PAD):
    """Fuse branch1/branch2/trunk per-layer weights into block-diagonal mats.

    Returns (W0, B0, W1, B1, W2, B2, W3r, B3r) matching deeponet_kernel.
    """
    p1, p2, pt = params["branch1"], params["branch2"], params["trunk"]

    # layer 0: block-diagonal over the lane-padded fused input [x1 | x2 | xc | 0]
    w10, b10 = p1[0]; w20, b20 = p2[0]; wt0, bt0 = pt[0]
    h1, h2, ht = w10.shape[1], w20.shape[1], wt0.shape[1]
    W0 = jnp.zeros((f_in, h1 + h2 + ht), jnp.float32)
    W0 = W0.at[0:d1, 0:h1].set(w10)
    W0 = W0.at[d1:d1 + d2, h1:h1 + h2].set(w20)
    W0 = W0.at[d1 + d2:d1 + d2 + dc, h1 + h2:h1 + h2 + ht].set(wt0)
    B0 = jnp.concatenate([b10, b20, bt0], axis=1)

    # layers 1 and 2: pure block-diagonal
    W1 = _block_diag([p1[1][0], p2[1][0], pt[1][0]])
    B1 = jnp.concatenate([p1[1][1], p2[1][1], pt[1][1]], axis=1)
    W2 = _block_diag([p1[2][0], p2[2][0], pt[2][0]])
    B2 = jnp.concatenate([p1[2][1], p2[2][1], pt[2][1]], axis=1)

    # final layer: pre-transposed and pre-fused with the epilogue structure.
    # row 0 computes branch1(x1)+branch2(x2), row 1 computes trunk(xc).
    w13, b13 = p1[3]; w23, b23 = p2[3]; wt3, bt3 = pt[3]
    n1, n2, nt = w13.shape[0], w23.shape[0], wt3.shape[0]
    W3r = jnp.zeros((2, n1 + n2 + nt), jnp.float32)
    W3r = W3r.at[0, 0:n1].set(w13[:, 0])
    W3r = W3r.at[0, n1:n1 + n2].set(w23[:, 0])
    W3r = W3r.at[1, n1 + n2:].set(wt3[:, 0])
    B3r = jnp.stack([b13[0] + b23[0], bt3[0]], axis=0)   # (2, 1)

    return (W0, B0, W1, B1, W2, B2, W3r, B3r)


def _const_block_spec(arr):
    nd = arr.ndim
    return pl.BlockSpec(tuple(arr.shape), lambda i, _nd=nd: (0,) * _nd)


# ---------------- wrapper -----------------------------------------------------
def deeponet_forward(input_data1, input_data2, spatial_coords, params,
                     tile_r=DEFAULT_TILE_R):
    """input_data1/2: (B, Nq, NPOINTS), spatial_coords: (B, Nq, 3).
    params: dict 'branch1'/'branch2'/'trunk' -> list of (W, b),
    W: (in, out), b: (1, out).  Returns (B, Nq, 1)."""
    B, Nq, d1 = input_data1.shape
    d2 = input_data2.shape[-1]
    dc = spatial_coords.shape[-1]
    R = B * Nq

    TILE_R = min(tile_r, _round_up(R, 8))
    R_pad = _round_up(R, TILE_R)
    num_tiles = R_pad // TILE_R

    # fused, lane-padded input rows: [x1 | x2 | xc | 0...]
    x = jnp.zeros((R_pad, F_IN_PAD), jnp.float32)
    x = x.at[:R, 0:d1].set(input_data1.reshape(R, d1).astype(jnp.float32))
    x = x.at[:R, d1:d1 + d2].set(input_data2.reshape(R, d2).astype(jnp.float32))
    x = x.at[:R, d1 + d2:d1 + d2 + dc].set(
        spatial_coords.reshape(R, dc).astype(jnp.float32))

    fused = pack_fused_params(params, d1, d2, dc)

    out = pl.pallas_call(
        deeponet_kernel,
        out_shape=jax.ShapeDtypeStruct((num_tiles, 1, TILE_R), jnp.float32),
        grid=(num_tiles,),
        in_specs=[pl.BlockSpec((TILE_R, F_IN_PAD), lambda i: (i, 0))]
                 + [_const_block_spec(a) for a in fused],
        out_specs=pl.BlockSpec((1, 1, TILE_R), lambda i: (i, 0, 0)),
        compiler_params=pltpu.CompilerParams(
            dimension_semantics=("parallel",)),
    )(x, *fused)

    return out.reshape(-1)[:R].reshape(B, Nq, 1)


# ---------------- deterministic parameter init (PyTorch Linear default) -------
def init_linear_params(key, layers):
    """Returns list of (W, b), W: (in, out), b: (1, out), U(-1/sqrt(in), 1/sqrt(in))."""
    params = []
    for i in range(len(layers) - 1):
        key, kw, kb = jax.random.split(key, 3)
        fan_in, fan_out = layers[i], layers[i + 1]
        bound = 1.0 / np.sqrt(fan_in)
        w = jax.random.uniform(kw, (fan_in, fan_out), jnp.float32, -bound, bound)
        b = jax.random.uniform(kb, (1, fan_out), jnp.float32, -bound, bound)
        params.append((w, b))
    return params, key


# ---------------- pure-JAX reference (for correctness check) ------------------
def reference_forward(input_data1, input_data2, spatial_coords, params):
    def mlp(x, ps):
        h = x
        for (w, b) in ps[:-1]:
            h = jnp.maximum(h @ w + b, 0.0)
        w, b = ps[-1]
        return h @ w + b

    b1 = mlp(input_data1, params["branch1"])
    b2 = mlp(input_data2, params["branch2"])
    t = mlp(spatial_coords, params["trunk"])
    return jnp.sum((b1 + b2) * t, axis=2, keepdims=True)


# ---------------- main --------------------------------------------------------
if __name__ == "__main__":
    key = jax.random.PRNGKey(0)

    # parameters
    p_branch1, key = init_linear_params(key, BRANCH_LAYERS1)
    p_branch2, key = init_linear_params(key, BRANCH_LAYERS2)
    p_trunk, key = init_linear_params(key, TRUNK_LAYERS)
    params = {"branch1": p_branch1, "branch2": p_branch2, "trunk": p_trunk}

    # inputs: (batch=2, n_query=8, features)
    B, Nq = 2, 8
    key, k1, k2, k3 = jax.random.split(key, 4)
    input_data1 = jax.random.normal(k1, (B, Nq, NPOINTS), jnp.float32)
    input_data2 = jax.random.normal(k2, (B, Nq, NPOINTS), jnp.float32)
    spatial_coords = jax.random.normal(k3, (B, Nq, 3), jnp.float32)

    out = deeponet_forward(input_data1, input_data2, spatial_coords, params)
    out = jax.block_until_ready(out)

    ref = reference_forward(input_data1, input_data2, spatial_coords, params)
    ref = jax.block_until_ready(ref)

    assert out.shape == (B, Nq, 1), f"bad output shape {out.shape}"
    np.testing.assert_allclose(np.asarray(out), np.asarray(ref), rtol=1e-5, atol=1e-5)

    print("KERNEL_OK")
</pallas_src>

<mosaic_0001>
module attributes {stable_mosaic.version = 11 : i64} {
  func.func @deeponet_kernel(%arg0: i32, %arg1: memref<16x128xf32, #tpu.memory_space<vmem>>, %arg2: memref<128x36xf32, #tpu.memory_space<vmem>>, %arg3: memref<1x36xf32, #tpu.memory_space<vmem>>, %arg4: memref<36x72xf32, #tpu.memory_space<vmem>>, %arg5: memref<1x72xf32, #tpu.memory_space<vmem>>, %arg6: memref<72x36xf32, #tpu.memory_space<vmem>>, %arg7: memref<1x36xf32, #tpu.memory_space<vmem>>, %arg8: memref<2x36xf32, #tpu.memory_space<vmem>>, %arg9: memref<2x1xf32, #tpu.memory_space<vmem>>, %arg10: memref<1x1x16xf32, #tpu.memory_space<vmem>>) attributes {dimension_semantics = [#tpu.dimension_semantics<parallel>], iteration_bounds = array<i64: 1>, scalar_prefetch = 0 : i64, scratch_operands = 0 : i64, tpu.core_type = #tpu.core_type<tc>, window_params = [{transform_indices = @transform_0, window_bounds = array<i64: 16, 128>}, {pipeline_mode = #tpu.pipeline_mode<synchronous>, transform_indices = @transform_1, window_bounds = array<i64: 128, 36>}, {pipeline_mode = #tpu.pipeline_mode<synchronous>, transform_indices = @transform_2, window_bounds = array<i64: 1, 36>}, {pipeline_mode = #tpu.pipeline_mode<synchronous>, transform_indices = @transform_3, window_bounds = array<i64: 36, 72>}, {pipeline_mode = #tpu.pipeline_mode<synchronous>, transform_indices = @transform_4, window_bounds = array<i64: 1, 72>}, {pipeline_mode = #tpu.pipeline_mode<synchronous>, transform_indices = @transform_5, window_bounds = array<i64: 72, 36>}, {pipeline_mode = #tpu.pipeline_mode<synchronous>, transform_indices = @transform_6, window_bounds = array<i64: 1, 36>}, {pipeline_mode = #tpu.pipeline_mode<synchronous>, transform_indices = @transform_7, window_bounds = array<i64: 2, 36>}, {pipeline_mode = #tpu.pipeline_mode<synchronous>, transform_indices = @transform_8, window_bounds = array<i64: 2, 1>}, {transform_indices = @transform_9, window_bounds = array<i64: 1, 1, 16>}]} {
    %c0 = arith.constant 0 : index
    %c0_0 = arith.constant 0 : index
    %0 = vector.load %arg1[%c0, %c0_0] : memref<16x128xf32, #tpu.memory_space<vmem>>, vector<16x128xf32>
    %c0_1 = arith.constant 0 : index
    %c0_2 = arith.constant 0 : index
    %1 = vector.load %arg2[%c0_1, %c0_2] : memref<128x36xf32, #tpu.memory_space<vmem>>, vector<128x36xf32>
    %cst = arith.constant dense<0.000000e+00> : vector<16x36xf32>
    %2 = tpu.matmul %0, %1, %cst {dimension_numbers = #tpu.dot_dimension_numbers<[1], [0], [0], [1], [0, 0, 1, 1], [], []>} : vector<16x128xf32>, vector<128x36xf32>, vector<16x36xf32> -> vector<16x36xf32>
    %c0_3 = arith.constant 0 : index
    %c0_4 = arith.constant 0 : index
    %3 = vector.load %arg3[%c0_3, %c0_4] : memref<1x36xf32, #tpu.memory_space<vmem>>, vector<1x36xf32>
    %4 = vector.broadcast %3 : vector<1x36xf32> to vector<16x36xf32>
    %5 = arith.addf %2, %4 : vector<16x36xf32>
    %cst_5 = arith.constant 0.000000e+00 : f32
    %6 = vector.broadcast %cst_5 : f32 to vector<16x36xf32>
    %7 = arith.maximumf %5, %6 : vector<16x36xf32>
    %c0_6 = arith.constant 0 : index
    %c0_7 = arith.constant 0 : index
    %8 = vector.load %arg4[%c0_6, %c0_7] : memref<36x72xf32, #tpu.memory_space<vmem>>, vector<36x72xf32>
    %cst_8 = arith.constant dense<0.000000e+00> : vector<16x72xf32>
    %9 = tpu.matmul %7, %8, %cst_8 {dimension_numbers = #tpu.dot_dimension_numbers<[1], [0], [0], [1], [0, 0, 1, 1], [], []>} : vector<16x36xf32>, vector<36x72xf32>, vector<16x72xf32> -> vector<16x72xf32>
    %c0_9 = arith.constant 0 : index
    %c0_10 = arith.constant 0 : index
    %10 = vector.load %arg5[%c0_9, %c0_10] : memref<1x72xf32, #tpu.memory_space<vmem>>, vector<1x72xf32>
    %11 = vector.broadcast %10 : vector<1x72xf32> to vector<16x72xf32>
    %12 = arith.addf %9, %11 : vector<16x72xf32>
    %cst_11 = arith.constant 0.000000e+00 : f32
    %13 = vector.broadcast %cst_11 : f32 to vector<16x72xf32>
    %14 = arith.maximumf %12, %13 : vector<16x72xf32>
    %c0_12 = arith.constant 0 : index
    %c0_13 = arith.constant 0 : index
    %15 = vector.load %arg6[%c0_12, %c0_13] : memref<72x36xf32, #tpu.memory_space<vmem>>, vector<72x36xf32>
    %cst_14 = arith.constant dense<0.000000e+00> : vector<16x36xf32>
    %16 = tpu.matmul %14, %15, %cst_14 {dimension_numbers = #tpu.dot_dimension_numbers<[1], [0], [0], [1], [0, 0, 1, 1], [], []>} : vector<16x72xf32>, vector<72x36xf32>, vector<16x36xf32> -> vector<16x36xf32>
    %c0_15 = arith.constant 0 : index
    %c0_16 = arith.constant 0 : index
    %17 = vector.load %arg7[%c0_15, %c0_16] : memref<1x36xf32, #tpu.memory_space<vmem>>, vector<1x36xf32>
    %18 = vector.broadcast %17 : vector<1x36xf32> to vector<16x36xf32>
    %19 = arith.addf %16, %18 : vector<16x36xf32>
    %cst_17 = arith.constant 0.000000e+00 : f32
    %20 = vector.broadcast %cst_17 : f32 to vector<16x36xf32>
    %21 = arith.maximumf %19, %20 : vector<16x36xf32>
    %c0_18 = arith.constant 0 : index
    %c0_19 = arith.constant 0 : index
    %22 = vector.load %arg8[%c0_18, %c0_19] : memref<2x36xf32, #tpu.memory_space<vmem>>, vector<2x36xf32>
    %cst_20 = arith.constant dense<0.000000e+00> : vector<2x16xf32>
    %23 = tpu.matmul %22, %21, %cst_20 {dimension_numbers = #tpu.dot_dimension_numbers<[1], [1], [0], [0], [0, 0, 1, 0], [], []>} : vector<2x36xf32>, vector<16x36xf32>, vector<2x16xf32> -> vector<2x16xf32>
    %c0_21 = arith.constant 0 : index
    %c0_22 = arith.constant 0 : index
    %24 = vector.load %arg9[%c0_21, %c0_22] : memref<2x1xf32, #tpu.memory_space<vmem>>, vector<2x1xf32>
    %25 = vector.broadcast %24 : vector<2x1xf32> to vector<2x16xf32>
    %26 = arith.addf %23, %25 : vector<2x16xf32>
    %27 = vector.extract_strided_slice %26 {offsets = [0, 0], sizes = [1, 16], strides = [1, 1]} : vector<2x16xf32> to vector<1x16xf32>
    %28 = vector.extract_strided_slice %26 {offsets = [1, 0], sizes = [1, 16], strides = [1, 1]} : vector<2x16xf32> to vector<1x16xf32>
    %29 = arith.mulf %27, %28 : vector<1x16xf32>
    %30 = vector.shape_cast %29 : vector<1x16xf32> to vector<1x1x16xf32>
    %c0_23 = arith.constant 0 : index
    %c0_24 = arith.constant 0 : index
    %c0_25 = arith.constant 0 : index
    %31 = vector.load %arg10[%c0_23, %c0_24, %c0_25] : memref<1x1x16xf32, #tpu.memory_space<vmem>>, vector<1x1x16xf32>
    tpu.vector_store %arg10[%c0_23, %c0_24, %c0_25], %30 {strides = array<i32>} : memref<1x1x16xf32, #tpu.memory_space<vmem>>, vector<1x1x16xf32>,
    return
  }
  func.func @transform_0(%arg0: i32) -> (i32, i32) {
    %c0_i32 = arith.constant 0 : i32
    %c0_i32_0 = arith.constant 0 : i32
    return %arg0, %c0_i32 : i32, i32
  }
  func.func @transform_1(%arg0: i32) -> (i32, i32) {
    %c0_i32 = arith.constant 0 : i32
    %c0_i32_0 = arith.constant 0 : i32
    %c0_i32_1 = arith.constant 0 : i32
    return %c0_i32, %c0_i32_0 : i32, i32
  }
  func.func @transform_2(%arg0: i32) -> (i32, i32) {
    %c0_i32 = arith.constant 0 : i32
    %c0_i32_0 = arith.constant 0 : i32
    %c0_i32_1 = arith.constant 0 : i32
    return %c0_i32, %c0_i32_0 : i32, i32
  }
  func.func @transform_3(%arg0: i32) -> (i32, i32) {
    %c0_i32 = arith.constant 0 : i32
    %c0_i32_0 = arith.constant 0 : i32
    %c0_i32_1 = arith.constant 0 : i32
    return %c0_i32, %c0_i32_0 : i32, i32
  }
  func.func @transform_4(%arg0: i32) -> (i32, i32) {
    %c0_i32 = arith.constant 0 : i32
    %c0_i32_0 = arith.constant 0 : i32
    %c0_i32_1 = arith.constant 0 : i32
    return %c0_i32, %c0_i32_0 : i32, i32
  }
  func.func @transform_5(%arg0: i32) -> (i32, i32) {
    %c0_i32 = arith.constant 0 : i32
    %c0_i32_0 = arith.constant 0 : i32
    %c0_i32_1 = arith.constant 0 : i32
    return %c0_i32, %c0_i32_0 : i32, i32
  }
  func.func @transform_6(%arg0: i32) -> (i32, i32) {
    %c0_i32 = arith.constant 0 : i32
    %c0_i32_0 = arith.constant 0 : i32
    %c0_i32_1 = arith.constant 0 : i32
    return %c0_i32, %c0_i32_0 : i32, i32
  }
  func.func @transform_7(%arg0: i32) -> (i32, i32) {
    %c0_i32 = arith.constant 0 : i32
    %c0_i32_0 = arith.constant 0 : i32
    %c0_i32_1 = arith.constant 0 : i32
    return %c0_i32, %c0_i32_0 : i32, i32
  }
  func.func @transform_8(%arg0: i32) -> (i32, i32) {
    %c0_i32 = arith.constant 0 : i32
    %c0_i32_0 = arith.constant 0 : i32
    %c0_i32_1 = arith.constant 0 : i32
    return %c0_i32, %c0_i32_0 : i32, i32
  }
  func.func @transform_9(%arg0: i32) -> (i32, i32, i32) {
    %c0_i32 = arith.constant 0 : i32
    %c0_i32_0 = arith.constant 0 : i32
    %c0_i32_1 = arith.constant 0 : i32
    return %arg0, %c0_i32, %c0_i32_0 : i32, i32, i32
  }
}

</mosaic_0001>

<llo_original>
// kernel: tpu_custom_call.1
$region0: #{tpu_custom_call.1}
  #allocation0 [shape = 'u32[]', space=smem, size = 0x4, offset = 0x4, fixed_abs, tag = 'smem constant byte address 0x4 - core index']
  #allocation1 [shape = 'u32[144,128]{1,0:T(1,128)}', space=vmem, size = 0x12000, scoped, tag = 'internal scratch']
  %s0 = inlined_call_operand.vmem [shape: f32[16,128], index: 0, kind: input, shape index: {}]
  %s1 = inlined_call_operand.vmem [shape: f32[128,36], index: 1, kind: input, shape index: {}]
  %s2 = inlined_call_operand.vmem [shape: f32[1,36], index: 2, kind: input, shape index: {}]
  %s3 = inlined_call_operand.vmem [shape: f32[36,72], index: 3, kind: input, shape index: {}]
  %s4 = inlined_call_operand.vmem [shape: f32[1,72], index: 4, kind: input, shape index: {}]
  %s5 = inlined_call_operand.vmem [shape: f32[72,36], index: 5, kind: input, shape index: {}]
  %s6 = inlined_call_operand.vmem [shape: f32[1,36], index: 6, kind: input, shape index: {}]
  %s7 = inlined_call_operand.vmem [shape: f32[2,36], index: 7, kind: input, shape index: {}]
  %s8 = inlined_call_operand.vmem [shape: f32[2,1], index: 8, kind: input, shape index: {}]
  %s9 = inlined_call_operand.hbm [shape: f32[1,1,16], index: 9, kind: output, shape index: {}]
  %s10 = sld [smem:[#allocation0]]
  $region46: #{tpu_custom_call.1} parent=0
    _
  %s12 = ssub.s32 1, %s10
  %s13 = scalar_select 0, %s12, %s10
  $region1: #{tpu_custom_call.1} parent=0
    #allocation2 [shape = 'u8[512]{0}', space=vmem, size = 0x400, scoped, tag = 'output window, operand 0, single buffered']
    #allocation3 [shape = 's32[1]{0}', space=sflag, size = 0x4, scoped, tag = 'scoped memory for tpu_custom_call.1']
    %14 = vsyncpa [#allocation3], 0
    // Predicated region
    $region2: #{tpu_custom_call.1} parent=1 // pred_check
      _
    $region3: #{tpu_custom_call.1} parent=1 // pred_check_branch
      %16 = sbr.rel (0) target = $region5
    $region4: #{tpu_custom_call.1} parent=1 // pred_region
      _
    $region5: #{tpu_custom_call.1} parent=1 // pred_fallthru
      _
    // Predicated region
    $region6: #{tpu_custom_call.1} parent=1 // pred_check
      _
    $region7: #{tpu_custom_call.1} parent=1 // pred_check_branch
      %18 = sbr.rel (0) target = $region9
    $region8: #{tpu_custom_call.1} parent=1 // pred_region
      _
    $region9: #{tpu_custom_call.1} parent=1 // pred_fallthru
      _
    // Predicated region
    $region10: #{tpu_custom_call.1} parent=1 // pred_check
      _
    $region11: #{tpu_custom_call.1} parent=1 // pred_check_branch
      %20 = sbr.rel (0) target = $region13
    $region12: #{tpu_custom_call.1} parent=1 // pred_region
      _
    $region13: #{tpu_custom_call.1} parent=1 // pred_fallthru
      _
    // Predicated region
    $region14: #{tpu_custom_call.1} parent=1 // pred_check
      _
    $region15: #{tpu_custom_call.1} parent=1 // pred_check_branch
      %22 = sbr.rel (0) target = $region17
    $region16: #{tpu_custom_call.1} parent=1 // pred_region
      _
    $region17: #{tpu_custom_call.1} parent=1 // pred_fallthru
      _
    // Predicated region
    $region18: #{tpu_custom_call.1} parent=1 // pred_check
      _
    $region19: #{tpu_custom_call.1} parent=1 // pred_check_branch
      %24 = sbr.rel (0) target = $region21
    $region20: #{tpu_custom_call.1} parent=1 // pred_region
      _
    $region21: #{tpu_custom_call.1} parent=1 // pred_fallthru
      _
    // Predicated region
    $region22: #{tpu_custom_call.1} parent=1 // pred_check
      _
    $region23: #{tpu_custom_call.1} parent=1 // pred_check_branch
      %26 = sbr.rel (0) target = $region25
    $region24: #{tpu_custom_call.1} parent=1 // pred_region
      _
    $region25: #{tpu_custom_call.1} parent=1 // pred_fallthru
      _
    // Predicated region
    $region26: #{tpu_custom_call.1} parent=1 // pred_check
      _
    $region27: #{tpu_custom_call.1} parent=1 // pred_check_branch
      %28 = sbr.rel (0) target = $region29
    $region28: #{tpu_custom_call.1} parent=1 // pred_region
      _
    $region29: #{tpu_custom_call.1} parent=1 // pred_fallthru
      _
    // Predicated region
    $region30: #{tpu_custom_call.1} parent=1 // pred_check
      _
    $region31: #{tpu_custom_call.1} parent=1 // pred_check_branch
      %30 = sbr.rel (0) target = $region33
    $region32: #{tpu_custom_call.1} parent=1 // pred_region
      _
    $region33: #{tpu_custom_call.1} parent=1 // pred_fallthru
      _
    // Predicated region
    $region34: #{tpu_custom_call.1} parent=1 // pred_check
      _
    $region35: #{tpu_custom_call.1} parent=1 // pred_check_branch
      %32 = sbr.rel (0) target = $region37
    $region36: #{tpu_custom_call.1} parent=1 // pred_region
      _
    $region37: #{tpu_custom_call.1} parent=1 // pred_fallthru
      _
    %v33 = vld [vmem:[%s0] sm:$0xff]
    %v34 = vld [vmem:[%s0 + $0x8] sm:$0xff]
    %v35 = vld [vmem:[%s1] sm:$0xff]
    %v36 = vld [vmem:[%s1 + $0x8] sm:$0xff]
    %v37 = vld [vmem:[%s1 + $0x10] sm:$0xff]
    %v38 = vld [vmem:[%s1 + $0x18] sm:$0xff]
    %v39 = vld [vmem:[%s1 + $0x20] sm:$0xff]
    %v40 = vld [vmem:[%s1 + $0x28] sm:$0xff]
    %v41 = vld [vmem:[%s1 + $0x30] sm:$0xff]
    %v42 = vld [vmem:[%s1 + $0x38] sm:$0xff]
    %v43 = vld [vmem:[%s1 + $0x40] sm:$0xff]
    %v44 = vld [vmem:[%s1 + $0x48] sm:$0xff]
    %v45 = vld [vmem:[%s1 + $0x50] sm:$0xff]
    %v46 = vld [vmem:[%s1 + $0x58] sm:$0xff]
    %v47 = vld [vmem:[%s1 + $0x60] sm:$0xff]
    %v48 = vld [vmem:[%s1 + $0x68] sm:$0xff]
    %v49 = vld [vmem:[%s1 + $0x70] sm:$0xff]
    %v50 = vld [vmem:[%s1 + $0x78] sm:$0xff]
    %v51 = vld [vmem:[%s2] sm:$0x1]
    %v53 = vlaneseq
    %v54 = vshrl.u32 %v53, 7
    %v55 = vsub.s32 0, %v54
    %v56 = vrot.slane %v51, %v55
    %58 = vmatprep.subr.mxu0 0.0
    %59 = vmatpush1.msra.mxu0 %v35
    %60 = vmatprep.subr.mxu0 0.0
    %61 = vmatpush1.msra.mxu0 %v36
    %62 = vmatprep.subr.mxu0 0.0
    %63 = vmatpush1.msra.mxu0 %v37
    %64 = vmatprep.subr.mxu0 0.0
    %65 = vmatpush1.msra.mxu0 %v38
    %66 = vmatprep.subr.mxu0 0.0
    %67 = vmatpush1.msra.mxu0 %v39
    %68 = vmatprep.subr.mxu0 0.0
    %69 = vmatpush1.msra.mxu0 %v40
    %70 = vmatprep.subr.mxu0 0.0
    %71 = vmatpush1.msra.mxu0 %v41
    %72 = vmatprep.subr.mxu0 0.0
    %73 = vmatpush1.msra.mxu0 %v42
    %74 = vmatprep.subr.mxu0 0.0
    %75 = vmatpush1.msra.mxu0 %v43
    %76 = vmatprep.subr.mxu0 0.0
    %77 = vmatpush1.msra.mxu0 %v44
    %78 = vmatprep.subr.mxu0 0.0
    %79 = vmatpush1.msra.mxu0 %v45
    %80 = vmatprep.subr.mxu0 0.0
    %81 = vmatpush1.msra.mxu0 %v46
    %82 = vmatprep.subr.mxu0 0.0
    %83 = vmatpush1.msra.mxu0 %v47
    %84 = vmatprep.subr.mxu0 0.0
    %85 = vmatpush1.msra.mxu0 %v48
    %86 = vmatprep.subr.mxu0 0.0
    %87 = vmatpush1.msra.mxu0 %v49
    %88 = vmatprep.subr.mxu0 0.0
    %89 = vmatpush1.msra.mxu0 %v50
    %90 = vmatprep.subr.mxu0 0.0
    %91 = vmatpush1.msra.mxu0 0.0
    %92 = vmatprep.subr.mxu0 0.0
    %93 = vmatpush1.msra.mxu0 0.0
    %94 = vmatprep.subr.mxu0 0.0
    %95 = vmatpush1.msra.mxu0 0.0
    %96 = vmatprep.subr.mxu0 0.0
    %97 = vmatpush1.msra.mxu0 0.0
    %98 = vmatprep.subr.mxu0 0.0
    %99 = vmatpush1.msra.mxu0 0.0
    %100 = vmatprep.subr.mxu0 0.0
    %101 = vmatpush1.msra.mxu0 0.0
    %102 = vmatprep.subr.mxu0 0.0
    %103 = vmatpush1.msra.mxu0 0.0
    %104 = vmatprep.subr.mxu0 0.0
    %105 = vmatpush1.msra.mxu0 0.0
    %106 = vmatprep.subr.mxu0 0.0
    %107 = vmatpush1.msra.mxu0 0.0
    %108 = vmatprep.subr.mxu0 0.0
    %109 = vmatpush1.msra.mxu0 0.0
    %110 = vmatprep.subr.mxu0 0.0
    %111 = vmatpush1.msra.mxu0 0.0
    %112 = vmatprep.subr.mxu0 0.0
    %113 = vmatpush1.msra.mxu0 0.0
    %114 = vmatprep.subr.mxu0 0.0
    %115 = vmatpush1.msra.mxu0 0.0
    %116 = vmatprep.subr.mxu0 0.0
    %117 = vmatpush1.msra.mxu0 0.0
    %118 = vmatprep.subr.mxu0 0.0
    %119 = vmatpush1.msra.mxu0 0.0
    %120 = vmatprep.subr.mxu0 0.0
    %121 = vmatpush1.msra.mxu0 0.0
    %122 = vmatprep.mubr.f32.mxu0 0.0
    %123 = vmatmul.mubr.f32.gmra.mrb[0].mxu0 %v33
    %v124 = vpop.f32.mrb[0].mxu0
    %v125 = vadd.f32 %v56, %v124
    %v126 = vpop.f32.mrb[0].mxu0
    %127 = vmatprep.mubr.f32.mxu0 0.0
    %128 = vmatmul.mubr.f32.gmra.mrb[0].mxu0 %v34
    %v129 = vpop.f32.mrb[0].mxu0
    %v130 = vadd.f32 %v56, %v129
    %v131 = vpop.f32.mrb[0].mxu0
    %132 = vdwg.mxu0
    %v133 = vmax.f32 %v125, 0.0
    %v134 = vmax.f32 %v130, 0.0
    %v135 = vld [vmem:[%s3] sm:$0xff]
    %v136 = vld [vmem:[%s3 + $0x8] sm:$0xff]
    %v137 = vld [vmem:[%s3 + $0x10] sm:$0xff]
    %v138 = vld [vmem:[%s3 + $0x18] sm:$0xff]
    %v139 = vld [vmem:[%s3 + $0x20] sm:$0xf]
    %v140 = vld [vmem:[%s4] sm:$0x1]
    %v142 = vlaneseq
    %v143 = vshrl.u32 %v142, 7
    %v144 = vsub.s32 0, %v143
    %v145 = vrot.slane %v140, %v144
    %vm147 = vcmask 293888
    %v149 = vsel %vm147, %v133, 0
    %v152 = vsel %vm147, %v134, 0
    %vm154 = vcmask 1043456
    %v156 = vsel %vm154, %v139, 0
    %158 = vmatprep.subr.mxu0 0.0
    %159 = vmatpush1.msra.mxu0 %v135
    %160 = vmatprep.subr.mxu0 0.0
    %161 = vmatpush1.msra.mxu0 %v136
    %162 = vmatprep.subr.mxu0 0.0
    %163 = vmatpush1.msra.mxu0 %v137
    %164 = vmatprep.subr.mxu0 0.0
    %165 = vmatpush1.msra.mxu0 %v138
    %166 = vmatprep.subr.mxu0 0.0
    %167 = vmatpush1.msra.mxu0 %v156
    %168 = vmatprep.subr.mxu0 0.0
    %169 = vmatpush1.msra.mxu0 0.0
    %170 = vmatprep.subr.mxu0 0.0
    %171 = vmatpush1.msra.mxu0 0.0
    %172 = vmatprep.subr.mxu0 0.0
    %173 = vmatpush1.msra.mxu0 0.0
    %174 = vmatprep.subr.mxu0 0.0
    %175 = vmatpush1.msra.mxu0 0.0
    %176 = vmatprep.subr.mxu0 0.0
    %177 = vmatpush1.msra.mxu0 0.0
    %178 = vmatprep.subr.mxu0 0.0
    %179 = vmatpush1.msra.mxu0 0.0
    %180 = vmatprep.subr.mxu0 0.0
    %181 = vmatpush1.msra.mxu0 0.0
    %182 = vmatprep.subr.mxu0 0.0
    %183 = vmatpush1.msra.mxu0 0.0
    %184 = vmatprep.subr.mxu0 0.0
    %185 = vmatpush1.msra.mxu0 0.0
    %186 = vmatprep.subr.mxu0 0.0
    %187 = vmatpush1.msra.mxu0 0.0
    %188 = vmatprep.subr.mxu0 0.0
    %189 = vmatpush1.msra.mxu0 0.0
    %190 = vmatprep.subr.mxu0 0.0
    %191 = vmatpush1.msra.mxu0 0.0
    %192 = vmatprep.subr.mxu0 0.0
    %193 = vmatpush1.msra.mxu0 0.0
    %194 = vmatprep.subr.mxu0 0.0
    %195 = vmatpush1.msra.mxu0 0.0
    %196 = vmatprep.subr.mxu0 0.0
    %197 = vmatpush1.msra.mxu0 0.0
    %198 = vmatprep.subr.mxu0 0.0
    %199 = vmatpush1.msra.mxu0 0.0
    %200 = vmatprep.subr.mxu0 0.0
    %201 = vmatpush1.msra.mxu0 0.0
    %202 = vmatprep.subr.mxu0 0.0
    %203 = vmatpush1.msra.mxu0 0.0
    %204 = vmatprep.subr.mxu0 0.0
    %205 = vmatpush1.msra.mxu0 0.0
    %206 = vmatprep.subr.mxu0 0.0
    %207 = vmatpush1.msra.mxu0 0.0
    %208 = vmatprep.subr.mxu0 0.0
    %209 = vmatpush1.msra.mxu0 0.0
    %210 = vmatprep.subr.mxu0 0.0
    %211 = vmatpush1.msra.mxu0 0.0
    %212 = vmatprep.subr.mxu0 0.0
    %213 = vmatpush1.msra.mxu0 0.0
    %214 = vmatprep.subr.mxu0 0.0
    %215 = vmatpush1.msra.mxu0 0.0
    %216 = vmatprep.subr.mxu0 0.0
    %217 = vmatpush1.msra.mxu0 0.0
    %218 = vmatprep.subr.mxu0 0.0
    %219 = vmatpush1.msra.mxu0 0.0
    %220 = vmatprep.subr.mxu0 0.0
    %221 = vmatpush1.msra.mxu0 0.0
    %222 = vmatprep.mubr.f32.mxu0 0.0
    %223 = vmatmul.mubr.f32.gmra.mrb[0].mxu0 %v149
    %v224 = vpop.f32.mrb[0].mxu0
    %v225 = vadd.f32 %v145, %v224
    %v226 = vpop.f32.mrb[0].mxu0
    %227 = vmatprep.mubr.f32.mxu0 0.0
    %228 = vmatmul.mubr.f32.gmra.mrb[0].mxu0 %v152
    %v229 = vpop.f32.mrb[0].mxu0
    %v230 = vadd.f32 %v145, %v229
    %v231 = vpop.f32.mrb[0].mxu0
    %232 = vdwg.mxu0
    %v233 = vmax.f32 %v225, 0.0
    %v234 = vmax.f32 %v230, 0.0
    %v235 = vld [vmem:[%s5] sm:$0xff]
    %v236 = vld [vmem:[%s5 + $0x8] sm:$0xff]
    %v237 = vld [vmem:[%s5 + $0x10] sm:$0xff]
    %v238 = vld [vmem:[%s5 + $0x18] sm:$0xff]
    %v239 = vld [vmem:[%s5 + $0x20] sm:$0xff]
    %v240 = vld [vmem:[%s5 + $0x28] sm:$0xff]
    %v241 = vld [vmem:[%s5 + $0x30] sm:$0xff]
    %v242 = vld [vmem:[%s5 + $0x38] sm:$0xff]
    %v243 = vld [vmem:[%s5 + $0x40] sm:$0xff]
    %v244 = vld [vmem:[%s6] sm:$0x1]
    %v246 = vlaneseq
    %v247 = vshrl.u32 %v246, 7
    %v248 = vsub.s32 0, %v247
    %v249 = vrot.slane %v244, %v248
    %vm251 = vcmask 588800
    %v253 = vsel %vm251, %v233, 0
    %v256 = vsel %vm251, %v234, 0
    %258 = vmatprep.subr.mxu0 0.0
    %259 = vmatpush1.msra.mxu0 %v235
    %260 = vmatprep.subr.mxu0 0.0
    %261 = vmatpush1.msra.mxu0 %v236
    %262 = vmatprep.subr.mxu0 0.0
    %263 = vmatpush1.msra.mxu0 %v237
    %264 = vmatprep.subr.mxu0 0.0
    %265 = vmatpush1.msra.mxu0 %v238
    %266 = vmatprep.subr.mxu0 0.0
    %267 = vmatpush1.msra.mxu0 %v239
    %268 = vmatprep.subr.mxu0 0.0
    %269 = vmatpush1.msra.mxu0 %v240
    %270 = vmatprep.subr.mxu0 0.0
    %271 = vmatpush1.msra.mxu0 %v241
    %272 = vmatprep.subr.mxu0 0.0
    %273 = vmatpush1.msra.mxu0 %v242
    %274 = vmatprep.subr.mxu0 0.0
    %275 = vmatpush1.msra.mxu0 %v243
    %276 = vmatprep.subr.mxu0 0.0
    %277 = vmatpush1.msra.mxu0 0.0
    %278 = vmatprep.subr.mxu0 0.0
    %279 = vmatpush1.msra.mxu0 0.0
    %280 = vmatprep.subr.mxu0 0.0
    %281 = vmatpush1.msra.mxu0 0.0
    %282 = vmatprep.subr.mxu0 0.0
    %283 = vmatpush1.msra.mxu0 0.0
    %284 = vmatprep.subr.mxu0 0.0
    %285 = vmatpush1.msra.mxu0 0.0
    %286 = vmatprep.subr.mxu0 0.0
    %287 = vmatpush1.msra.mxu0 0.0
    %288 = vmatprep.subr.mxu0 0.0
    %289 = vmatpush1.msra.mxu0 0.0
    %290 = vmatprep.subr.mxu0 0.0
    %291 = vmatpush1.msra.mxu0 0.0
    %292 = vmatprep.subr.mxu0 0.0
    %293 = vmatpush1.msra.mxu0 0.0
    %294 = vmatprep.subr.mxu0 0.0
    %295 = vmatpush1.msra.mxu0 0.0
    %296 = vmatprep.subr.mxu0 0.0
    %297 = vmatpush1.msra.mxu0 0.0
    %298 = vmatprep.subr.mxu0 0.0
    %299 = vmatpush1.msra.mxu0 0.0
    %300 = vmatprep.subr.mxu0 0.0
    %301 = vmatpush1.msra.mxu0 0.0
    %302 = vmatprep.subr.mxu0 0.0
    %303 = vmatpush1.msra.mxu0 0.0
    %304 = vmatprep.subr.mxu0 0.0
    %305 = vmatpush1.msra.mxu0 0.0
    %306 = vmatprep.subr.mxu0 0.0
    %307 = vmatpush1.msra.mxu0 0.0
    %308 = vmatprep.subr.mxu0 0.0
    %309 = vmatpush1.msra.mxu0 0.0
    %310 = vmatprep.subr.mxu0 0.0
    %311 = vmatpush1.msra.mxu0 0.0
    %312 = vmatprep.subr.mxu0 0.0
    %313 = vmatpush1.msra.mxu0 0.0
    %314 = vmatprep.subr.mxu0 0.0
    %315 = vmatpush1.msra.mxu0 0.0
    %316 = vmatprep.subr.mxu0 0.0
    %317 = vmatpush1.msra.mxu0 0.0
    %318 = vmatprep.subr.mxu0 0.0
    %319 = vmatpush1.msra.mxu0 0.0
    %320 = vmatprep.subr.mxu0 0.0
    %321 = vmatpush1.msra.mxu0 0.0
    %322 = vmatprep.mubr.f32.mxu0 0.0
    %323 = vmatmul.mubr.f32.gmra.mrb[0].mxu0 %v253
    %v324 = vpop.f32.mrb[0].mxu0
    %v325 = vadd.f32 %v249, %v324
    %v326 = vpop.f32.mrb[0].mxu0
    %327 = vmatprep.mubr.f32.mxu0 0.0
    %328 = vmatmul.mubr.f32.gmra.mrb[0].mxu0 %v256
    %v329 = vpop.f32.mrb[0].mxu0
    %v330 = vadd.f32 %v249, %v329
    %v331 = vpop.f32.mrb[0].mxu0
    %332 = vdwg.mxu0
    %v333 = vmax.f32 %v325, 0.0
    %v334 = vmax.f32 %v330, 0.0
    %v335 = vld [vmem:[%s7] sm:$0x3]
    %v336 = vld [vmem:[%s8] sm:$0x3]
    %338 = vset.pattern.permute.xlu0 0
    %339 = vperm.xlu0 %338, %v336
    %v340 = vpop.permute.xlu0 %339
    %v343 = vsel %vm147, %v335, 0
    %v346 = vsel %vm147, %v333, 0
    %v349 = vsel %vm147, %v334, 0
    %351 = vmatprep.subr.mxu0 0.0
    %352 = vmatpush1.xpose.msra.mxu0 %v346
    %353 = vmatprep.subr.mxu0 0.0
    %354 = vmatpush1.xpose.msra.mxu0 %v349
    %355 = vmatprep.subr.mxu0 0.0
    %356 = vmatpush1.xpose.msra.mxu0 0.0
    %357 = vmatprep.subr.mxu0 0.0
    %358 = vmatpush1.xpose.msra.mxu0 0.0
    %359 = vmatprep.subr.mxu0 0.0
    %360 = vmatpush1.xpose.msra.mxu0 0.0
    %361 = vmatprep.subr.mxu0 0.0
    %362 = vmatpush1.xpose.msra.mxu0 0.0
    %363 = vmatprep.subr.mxu0 0.0
    %364 = vmatpush1.xpose.msra.mxu0 0.0
    %365 = vmatprep.subr.mxu0 0.0
    %366 = vmatpush1.xpose.msra.mxu0 0.0
    %367 = vmatprep.subr.mxu0 0.0
    %368 = vmatpush1.xpose.msra.mxu0 0.0
    %369 = vmatprep.subr.mxu0 0.0
    %370 = vmatpush1.xpose.msra.mxu0 0.0
    %371 = vmatprep.subr.mxu0 0.0
    %372 = vmatpush1.xpose.msra.mxu0 0.0
    %373 = vmatprep.subr.mxu0 0.0
    %374 = vmatpush1.xpose.msra.mxu0 0.0
    %375 = vmatprep.subr.mxu0 0.0
    %376 = vmatpush1.xpose.msra.mxu0 0.0
    %377 = vmatprep.subr.mxu0 0.0
    %378 = vmatpush1.xpose.msra.mxu0 0.0
    %379 = vmatprep.subr.mxu0 0.0
    %380 = vmatpush1.xpose.msra.mxu0 0.0
    %381 = vmatprep.subr.mxu0 0.0
    %382 = vmatpush1.xpose.msra.mxu0 0.0
    %383 = vmatprep.subr.mxu0 0.0
    %384 = vmatpush1.xpose.msra.mxu0 0.0
    %385 = vmatprep.subr.mxu0 0.0
    %386 = vmatpush1.xpose.msra.mxu0 0.0
    %387 = vmatprep.subr.mxu0 0.0
    %388 = vmatpush1.xpose.msra.mxu0 0.0
    %389 = vmatprep.subr.mxu0 0.0
    %390 = vmatpush1.xpose.msra.mxu0 0.0
    %391 = vmatprep.subr.mxu0 0.0
    %392 = vmatpush1.xpose.msra.mxu0 0.0
    %393 = vmatprep.subr.mxu0 0.0
    %394 = vmatpush1.xpose.msra.mxu0 0.0
    %395 = vmatprep.subr.mxu0 0.0
    %396 = vmatpush1.xpose.msra.mxu0 0.0
    %397 = vmatprep.subr.mxu0 0.0
    %398 = vmatpush1.xpose.msra.mxu0 0.0
    %399 = vmatprep.subr.mxu0 0.0
    %400 = vmatpush1.xpose.msra.mxu0 0.0
    %401 = vmatprep.subr.mxu0 0.0
    %402 = vmatpush1.xpose.msra.mxu0 0.0
    %403 = vmatprep.subr.mxu0 0.0
    %404 = vmatpush1.xpose.msra.mxu0 0.0
    %405 = vmatprep.subr.mxu0 0.0
    %406 = vmatpush1.xpose.msra.mxu0 0.0
    %407 = vmatprep.subr.mxu0 0.0
    %408 = vmatpush1.xpose.msra.mxu0 0.0
    %409 = vmatprep.subr.mxu0 0.0
    %410 = vmatpush1.xpose.msra.mxu0 0.0
    %411 = vmatprep.subr.mxu0 0.0
    %412 = vmatpush1.xpose.msra.mxu0 0.0
    %413 = vmatprep.subr.mxu0 0.0
    %414 = vmatpush1.xpose.msra.mxu0 0.0
    %415 = vmatprep.mubr.f32.mxu0 0.0
    %416 = vmatmul.mubr.f32.gmra.mrb[0].mxu0 %v343
    %v417 = vpop.f32.mrb[0].mxu0
    %v418 = vadd.f32 %v340, %v417
    %v419 = vpop.f32.mrb[0].mxu0
    %420 = vdwg.mxu0
    %v422 = vrot.slane %v418, 1
    %v424 = vmul.f32 %v418, %v422
    %vm425 = vcmask 122880
    %426 = vst.msk [vmem:[#allocation2] sm:$0x1] %vm425, %v424
    // Predicated region
    $region38: #{tpu_custom_call.1} parent=1 // pred_check
      _
    $region39: #{tpu_custom_call.1} parent=1 // pred_check_branch
      %428 = sbr.rel (0) target = $region41
    $region40: #{tpu_custom_call.1} parent=1 // pred_region
      %s430 = ssub.s32 16, 16
      %431 = vsyncadd [#allocation3], %s430
      %s433 = sshll.u32 [#allocation2], 4
      %s434 = int_to_ptr.vmem [resolvable:$true] %s433
      %436 = dma.vmem_to_hbm [thread:$0]  %s434, 16, %s9, [#allocation3]
    $region41: #{tpu_custom_call.1} parent=1 // pred_fallthru
      _
    // Predicated region
    $region42: #{tpu_custom_call.1} parent=1 // pred_check
      _
    $region43: #{tpu_custom_call.1} parent=1 // pred_check_branch
      %438 = sbr.rel (0) target = $region45
    $region44: #{tpu_custom_call.1} parent=1 // pred_region
      %439 = dma.done [#allocation3], 16
    $region45: #{tpu_custom_call.1} parent=1 // pred_fallthru
      _
    %440 = vsyncpa [#allocation3], 1

</llo_original>
